<compile_context>
chip_gen: v6e
topology: v6e:2x2x1
jax: 0.10.0
libtpu: 0.0.40
codegen_flags: <defaults>
</compile_context>

<pallas_src>
import functools

import jax
import jax.numpy as jnp
from jax.experimental import pallas as pl
from jax.experimental.pallas import tpu as pltpu

LN_EPS = 1e-5
NEG_INF = -1e30        # finite "minus infinity" for the pad-key softmax mask


def _layernorm(z, g, b):
  # LayerNorm elementwise math kept in f32 (v5e VPU/EUP have no bf16 support).
  mu = jnp.mean(z, axis=-1, keepdims=True)
  var = jnp.mean(jnp.square(z - mu), axis=-1, keepdims=True)
  return (z - mu) * jax.lax.rsqrt(var + LN_EPS) * g + b


# ---------------------------------------------------------------------------
# Patch embedding:  Conv2d(k=p, stride=p)  ==  (rows, C*p*p) @ (C*p*p, D)
# ---------------------------------------------------------------------------
def patch_embed_kernel(x_ref, w_ref, b_ref, o_ref):
  x = x_ref[...].astype(jnp.bfloat16)                      # bf16 MXU operand
  o_ref[...] = (jnp.dot(x, w_ref[...], preferred_element_type=jnp.float32)
                + b_ref[...]).astype(o_ref.dtype)


def patch_embed(x_patches, w, b, *, tm=512):
  M, K = x_patches.shape
  D = w.shape[1]
  tm = min(tm, M)      # >=512-row tiles amortize the ~0.35us/step overhead
  return pl.pallas_call(
      patch_embed_kernel,
      out_shape=jax.ShapeDtypeStruct((M, D), jnp.float32),
      grid=(pl.cdiv(M, tm),),
      in_specs=[pl.BlockSpec((tm, K), lambda i: (i, 0)),
                pl.BlockSpec((K, D), lambda i: (0, 0)),
                pl.BlockSpec((1, D), lambda i: (0, 0))],
      out_specs=pl.BlockSpec((tm, D), lambda i: (i, 0)),
      compiler_params=pltpu.CompilerParams(dimension_semantics=("parallel",)),
  )(x_patches, w, b)


# ---------------------------------------------------------------------------
# Fused encoder stack + classifier
# ---------------------------------------------------------------------------
def encoder_stack_kernel(x_hbm,
                         ln1g, ln1b, wqkv, bqkv, wo, bo,
                         ln2g, ln2b, w1, b1, w2, b2,
                         clng, clnb, cw, cb,
                         o_ref, acc_ref, copy_sem, *, s_real):
  """One (batch-block, layer) grid step.

  grid = (B // Bt, L).  The f32 activation carry (Bt, S, D) lives in the
  acc_ref VMEM scratch across the whole layer loop; the only HBM writeback is
  the (Bt, 1, NC) logits block at the last layer.
  """
  bblk = pl.program_id(0)
  l = pl.program_id(1)
  Bt, S, D = acc_ref.shape

  # l == 0: pull this batch block's activations from HBM into the VMEM carry.
  # x is memory_space=ANY so it never occupies a double-buffered input slot.
  @pl.when(l == 0)
  def _():
    start = pl.multiple_of(bblk * Bt, Bt)
    cp = pltpu.make_async_copy(x_hbm.at[pl.ds(start, Bt)], acc_ref, copy_sem)
    cp.start()
    cp.wait()

  x = acc_ref[...]                                   # (Bt, S, D) f32 carry
  xf = x.reshape(Bt * S, D)                          # flatten: fill MXU M dim

  # --- pre-norm single-head self-attention + residual ----------------------
  x2 = _layernorm(xf, ln1g[0], ln1b[0])
  qkv = jnp.dot(x2.astype(jnp.bfloat16), wqkv[0],
                preferred_element_type=jnp.float32) + bqkv[0]     # (Bt*S, 3D)
  # NOTE: 1/sqrt(D) softmax scale is folded into the Q projection at init.
  q = qkv[:, :D].astype(jnp.bfloat16).reshape(Bt, S, D)
  k = qkv[:, D:2 * D].astype(jnp.bfloat16).reshape(Bt, S, D)
  v = qkv[:, 2 * D:].astype(jnp.bfloat16).reshape(Bt, S, D)

  s = jnp.einsum("bqd,bkd->bqk", q, k,
                 preferred_element_type=jnp.float32)              # (Bt, S, S)
  if s_real < S:   # mask padded key tokens (S rounded up to 8 sublanes)
    key_id = jax.lax.broadcasted_iota(jnp.int32, (Bt, S, S), 2)
    s = jnp.where(key_id < s_real, s, NEG_INF)
  s = s - jnp.max(s, axis=-1, keepdims=True)
  p = jnp.exp(s)
  attn = p * pl.reciprocal(jnp.sum(p, axis=-1, keepdims=True), approx=True)
  a = jnp.einsum("bqk,bkd->bqd", attn.astype(jnp.bfloat16), v,
                 preferred_element_type=jnp.float32)              # (Bt, S, D)
  a = jnp.dot(a.reshape(Bt * S, D).astype(jnp.bfloat16), wo[0],
              preferred_element_type=jnp.float32) + bo[0]
  xf = xf + a

  # --- pre-norm MLP (GELU) + residual ---------------------------------------
  x2 = _layernorm(xf, ln2g[0], ln2b[0])
  # TODO(synk): torch nn.GELU defaults to exact erf; tanh approximation used
  # here for guaranteed Mosaic lowering + EUP throughput.
  h = jax.nn.gelu(
      jnp.dot(x2.astype(jnp.bfloat16), w1[0],
              preferred_element_type=jnp.float32) + b1[0],
      approximate=True)
  xf = xf + jnp.dot(h.astype(jnp.bfloat16), w2[0],
                    preferred_element_type=jnp.float32) + b2[0]

  x_new = xf.reshape(Bt, S, D)
  acc_ref[...] = x_new

  # Last layer: fused classifier on the class token (row 0); only the logits
  # ever leave VMEM.
  @pl.when(l == pl.num_programs(1) - 1)
  def _():
    cls = x_new[:, 0, :]                                          # (Bt, D)
    c2 = _layernorm(cls, clng[...], clnb[...])
    logits = jnp.dot(c2.astype(jnp.bfloat16), cw[...],
                     preferred_element_type=jnp.float32) + cb[...]
    o_ref[...] = logits[:, None, :].astype(o_ref.dtype)


def _default_vmem_limit_bytes():
  # ~75% of physical VMEM per generation (v5e/v6e 128 MiB -> 96 MiB,
  # v7x 64 MiB -> 48 MiB), leaving headroom for compiler scratch.
  try:
    cap = int(pltpu.get_tpu_info().vmem_capacity_bytes)
  except Exception:                                    # older jax / no device
    cap = 64 * 1024 * 1024
  return (cap * 3) // 4


def _choose_block_b(batch, cap=8):
  # Largest divisor of `batch` <= cap.  Bigger blocks amortize the per-layer
  # weight stream (dominant HBM traffic).  For real workloads on v7x keep
  # batch // block_b >= 2 so the "parallel" axis shards across both
  # TensorCores, and pick block_b as a multiple of 8 when possible.
  bt = 1
  for d in range(1, min(batch, cap) + 1):
    if batch % d == 0:
      bt = d
  return bt


def encoder_stack(x, enc, cls_p, *, s_real, block_b=None, vmem_limit_bytes=None):
  """All transformer layers + final LN/classifier in a single pallas_call."""
  B, S, D = x.shape
  L = enc["wqkv"].shape[0]
  NC = cls_p["w"].shape[1]

  if block_b is None:
    block_b = _choose_block_b(B)
  assert B % block_b == 0, (B, block_b)
  if vmem_limit_bytes is None:
    vmem_limit_bytes = _default_vmem_limit_bytes()

  names = ["ln1g", "ln1b", "wqkv", "bqkv", "wo", "bo",
           "ln2g", "ln2b", "w1", "b1", "w2", "b2"]
  weights = [enc[n] for n in names]
  cls_args = [cls_p[n] for n in ("lng", "lnb", "w", "b")]

  def layer_spec(arr):              # (L, d1, d2) -> per-layer (1, d1, d2)
    _, d1, d2 = arr.shape
    return pl.BlockSpec((1, d1, d2), lambda b, l: (l, 0, 0))

  def const_spec(arr):              # classifier params, resident throughout
    return pl.BlockSpec(arr.shape, lambda b, l: (0,) * arr.ndim)

  in_specs = [pl.BlockSpec(memory_space=pl.ANY)]       # x: raw HBM, manual DMA
  in_specs += [layer_spec(w) for w in weights]
  in_specs += [const_spec(a) for a in cls_args]

  out = pl.pallas_call(
      functools.partial(encoder_stack_kernel, s_real=s_real),
      out_shape=jax.ShapeDtypeStruct((B, 1, NC), jnp.float32),
      grid=(B // block_b, L),
      in_specs=in_specs,
      out_specs=pl.BlockSpec((block_b, 1, NC), lambda b, l: (b, 0, 0)),
      scratch_shapes=[pltpu.VMEM((block_b, S, D), jnp.float32),
                      pltpu.SemaphoreType.DMA(())],
      compiler_params=pltpu.CompilerParams(
          dimension_semantics=("parallel", "arbitrary"),
          vmem_limit_bytes=int(vmem_limit_bytes)),
  )(x, *weights, *cls_args)
  return out.reshape(B, NC)


# ---------------------------------------------------------------------------
# Model: parameter init + forward
# ---------------------------------------------------------------------------
def init_vit_params(key, *, in_channels, patch_size, embedding_dim, mlp_size,
                    num_layers, num_classes, num_patches):
  D, P, MLP, NC, L = embedding_dim, patch_size, mlp_size, num_classes, num_layers
  K = in_channels * P * P
  ks = jax.random.split(key, 8)

  def bf16(a):
    return a.astype(jnp.bfloat16)

  params = {
      # torch.randn in the module -> standard normal
      "class_embedding": jax.random.normal(ks[0], (1, 1, D), jnp.float32),
      "position_embedding": jax.random.normal(
          ks[1], (1, num_patches + 1, D), jnp.float32),
      # Conv2d weight (D, C, p, p) reshaped to matmul form (K, D); stored bf16.
      "patch_w": bf16(0.02 * jax.random.normal(ks[2], (K, D), jnp.float32)),
      "patch_b": jnp.zeros((1, D), jnp.float32),
      "cls_lng": jnp.ones((1, D), jnp.float32),
      "cls_lnb": jnp.zeros((1, D), jnp.float32),
      "cls_w": bf16(0.02 * jax.random.normal(ks[3], (D, NC), jnp.float32)),
      "cls_b": jnp.zeros((1, NC), jnp.float32),
  }

  # Fold the 1/sqrt(D) attention scale into the Q projection (weights + bias)
  # once at parameter-prep time: no per-step (S, D) VPU multiply in the kernel.
  scale = float(D) ** -0.5
  wqkv = 0.02 * jax.random.normal(ks[4], (L, D, 3 * D), jnp.float32)
  wqkv = wqkv.at[:, :, :D].multiply(scale)
  bqkv = jnp.zeros((L, 1, 3 * D), jnp.float32)
  bqkv = bqkv.at[:, :, :D].multiply(scale)   # no-op on zeros; kept for clarity

  # Encoder weights stacked with a leading layer axis (single pallas_call);
  # MXU operand matrices stored bf16, LN / bias vectors kept f32.
  params["encoder"] = {
      "ln1g": jnp.ones((L, 1, D), jnp.float32),
      "ln1b": jnp.zeros((L, 1, D), jnp.float32),
      "wqkv": bf16(wqkv),                      # fused Q/K/V projection
      "bqkv": bqkv,
      "wo": bf16(0.02 * jax.random.normal(ks[5], (L, D, D), jnp.float32)),
      "bo": jnp.zeros((L, 1, D), jnp.float32),
      "ln2g": jnp.ones((L, 1, D), jnp.float32),
      "ln2b": jnp.zeros((L, 1, D), jnp.float32),
      "w1": bf16(0.02 * jax.random.normal(ks[6], (L, D, MLP), jnp.float32)),
      "b1": jnp.zeros((L, 1, MLP), jnp.float32),
      "w2": bf16(0.02 * jax.random.normal(ks[7], (L, MLP, D), jnp.float32)),
      "b2": jnp.zeros((L, 1, D), jnp.float32),
  }
  return params


def extract_patches(x, p):
  # x: (B, C, H, W) NCHW -> (B, num_patches, C*p*p)   (plain-JAX glue)
  B, C, H, W = x.shape
  x = x.reshape(B, C, H // p, p, W // p, p)
  x = x.transpose(0, 2, 4, 1, 3, 5)            # (B, H/p, W/p, C, p, p)
  return x.reshape(B, (H // p) * (W // p), C * p * p)


def vit_forward(params, x, patch_size):
  B = x.shape[0]
  D = params["patch_w"].shape[1]

  # Patch embedding (Conv2d-as-matmul in Pallas)
  patches = extract_patches(x, patch_size)               # (B, P, K)
  P = patches.shape[1]
  emb = patch_embed(patches.reshape(B * P, -1),
                    params["patch_w"], params["patch_b"]).reshape(B, P, D)

  # Prepend class token, add position embedding (elementwise glue)
  cls_tok = jnp.broadcast_to(params["class_embedding"], (B, 1, D))
  h = jnp.concatenate([cls_tok, emb], axis=1) + params["position_embedding"]
  # embedding_dropout / attn_dropout / mlp_dropout: identity in eval mode.

  # Pad the sequence to a multiple of 8 sublanes; pad keys are masked in the
  # kernel softmax and pad rows are never read (class token is row 0).
  s_real = P + 1
  s_pad = ((s_real + 7) // 8) * 8
  if s_pad != s_real:
    h = jnp.pad(h, ((0, 0), (0, s_pad - s_real), (0, 0)))

  cls_p = {"lng": params["cls_lng"], "lnb": params["cls_lnb"],
           "w": params["cls_w"], "b": params["cls_b"]}
  # Fused encoder + classifier: returns logits directly.
  return encoder_stack(h, params["encoder"], cls_p, s_real=s_real)


# ---------------------------------------------------------------------------
if __name__ == "__main__":
  # Small, shape-consistent configuration
  B, C, IMG, PATCH = 2, 3, 16, 8
  D, MLP, LAYERS, CLASSES = 128, 256, 2, 32
  NUM_PATCHES = (IMG // PATCH) ** 2            # 4 -> seq len 5, padded to 8

  key = jax.random.PRNGKey(0)
  pkey, xkey = jax.random.split(key)
  params = init_vit_params(pkey, in_channels=C, patch_size=PATCH,
                           embedding_dim=D, mlp_size=MLP, num_layers=LAYERS,
                           num_classes=CLASSES, num_patches=NUM_PATCHES)
  x = jax.random.normal(xkey, (B, C, IMG, IMG), jnp.float32)   # NCHW

  out = jax.block_until_ready(vit_forward(params, x, PATCH))
  assert out.shape == (B, CLASSES), out.shape
  assert bool(jnp.all(jnp.isfinite(out)))
  print("KERNEL_OK")
</pallas_src>

<mosaic_0001>
module attributes {stable_mosaic.version = 11 : i64} {
  func.func @patch_embed_kernel(%arg0: i32, %arg1: memref<8x192xf32, #tpu.memory_space<vmem>>, %arg2: memref<192x128xbf16, #tpu.memory_space<vmem>>, %arg3: memref<1x128xf32, #tpu.memory_space<vmem>>, %arg4: memref<8x128xf32, #tpu.memory_space<vmem>>) attributes {dimension_semantics = [#tpu.dimension_semantics<parallel>], iteration_bounds = array<i64: 1>, scalar_prefetch = 0 : i64, scratch_operands = 0 : i64, tpu.core_type = #tpu.core_type<tc>, window_params = [{transform_indices = @transform_0, window_bounds = array<i64: 8, 192>}, {pipeline_mode = #tpu.pipeline_mode<synchronous>, transform_indices = @transform_1, window_bounds = array<i64: 192, 128>}, {pipeline_mode = #tpu.pipeline_mode<synchronous>, transform_indices = @transform_2, window_bounds = array<i64: 1, 128>}, {transform_indices = @transform_3, window_bounds = array<i64: 8, 128>}]} {
    %c0 = arith.constant 0 : index
    %c0_0 = arith.constant 0 : index
    %0 = vector.load %arg1[%c0, %c0_0] : memref<8x192xf32, #tpu.memory_space<vmem>>, vector<8x192xf32>
    %1 = arith.truncf %0 : vector<8x192xf32> to vector<8x192xbf16>
    %c0_1 = arith.constant 0 : index
    %c0_2 = arith.constant 0 : index
    %2 = vector.load %arg2[%c0_1, %c0_2] : memref<192x128xbf16, #tpu.memory_space<vmem>>, vector<192x128xbf16>
    %cst = arith.constant dense<0.000000e+00> : vector<8x128xf32>
    %3 = tpu.matmul %1, %2, %cst {dimension_numbers = #tpu.dot_dimension_numbers<[1], [0], [0], [1], [0, 0, 1, 1], [], []>} : vector<8x192xbf16>, vector<192x128xbf16>, vector<8x128xf32> -> vector<8x128xf32>
    %c0_3 = arith.constant 0 : index
    %c0_4 = arith.constant 0 : index
    %4 = vector.load %arg3[%c0_3, %c0_4] : memref<1x128xf32, #tpu.memory_space<vmem>>, vector<1x128xf32>
    %5 = vector.broadcast %4 : vector<1x128xf32> to vector<8x128xf32>
    %6 = arith.addf %3, %5 : vector<8x128xf32>
    %c0_5 = arith.constant 0 : index
    %c0_6 = arith.constant 0 : index
    %7 = vector.load %arg4[%c0_5, %c0_6] : memref<8x128xf32, #tpu.memory_space<vmem>>, vector<8x128xf32>
    tpu.vector_store %arg4[%c0_5, %c0_6], %6 {strides = array<i32>} : memref<8x128xf32, #tpu.memory_space<vmem>>, vector<8x128xf32>,
    return
  }
  func.func @transform_0(%arg0: i32) -> (i32, i32) {
    %c0_i32 = arith.constant 0 : i32
    %c0_i32_0 = arith.constant 0 : i32
    return %arg0, %c0_i32 : i32, i32
  }
  func.func @transform_1(%arg0: i32) -> (i32, i32) {
    %c0_i32 = arith.constant 0 : i32
    %c0_i32_0 = arith.constant 0 : i32
    %c0_i32_1 = arith.constant 0 : i32
    return %c0_i32, %c0_i32_0 : i32, i32
  }
  func.func @transform_2(%arg0: i32) -> (i32, i32) {
    %c0_i32 = arith.constant 0 : i32
    %c0_i32_0 = arith.constant 0 : i32
    %c0_i32_1 = arith.constant 0 : i32
    return %c0_i32, %c0_i32_0 : i32, i32
  }
  func.func @transform_3(%arg0: i32) -> (i32, i32) {
    %c0_i32 = arith.constant 0 : i32
    %c0_i32_0 = arith.constant 0 : i32
    return %arg0, %c0_i32 : i32, i32
  }
}

</mosaic_0001>

<llo_original>
// kernel: tpu_custom_call.1
$region0: #{tpu_custom_call.1}
  #allocation0 [shape = 'u32[]', space=smem, size = 0x4, offset = 0x4, fixed_abs, tag = 'smem constant byte address 0x4 - core index']
  #allocation1 [shape = 'u32[144,128]{1,0:T(1,128)}', space=vmem, size = 0x12000, scoped, tag = 'internal scratch']
  %s0 = inlined_call_operand.hbm [shape: f32[8,192], index: 0, kind: input, shape index: {}]
  %s1 = inlined_call_operand.hbm [shape: bf16[192,128], index: 1, kind: input, shape index: {}]
  %s2 = inlined_call_operand.vmem [shape: f32[1,128], index: 2, kind: input, shape index: {}]
  %s3 = inlined_call_operand.hbm [shape: f32[8,128], index: 3, kind: output, shape index: {}]
  %s4 = sld [smem:[#allocation0]]
  $region30: #{tpu_custom_call.1} parent=0
    _
  %s6 = ssub.s32 1, %s4
  %s7 = scalar_select 0, %s6, %s4
  $region1: #{tpu_custom_call.1} parent=0
    #allocation2 [shape = 'u8[8192]{0}', space=vmem, size = 0x2000, scoped, tag = 'input window, operand 0, single buffered']
    #allocation3 [shape = 's32[1]{0}', space=sflag, size = 0x4, scoped, tag = 'scoped memory for tpu_custom_call.1']
    #allocation4 [shape = 's32[1]{0}', space=sflag, size = 0x4, scoped, tag = 'scoped memory for tpu_custom_call.1']
    #allocation5 [shape = 'u8[49152]{0}', space=vmem, size = 0xc000, scoped, tag = 'input window, operand 1, single buffered']
    #allocation6 [shape = 's32[1]{0}', space=sflag, size = 0x4, scoped, tag = 'scoped memory for tpu_custom_call.1']
    #allocation7 [shape = 'u8[4096]{0}', space=vmem, size = 0x1000, scoped, tag = 'output window, operand 0, single buffered']
    %8 = vsyncpa [#allocation3], 0
    %9 = vsyncpa [#allocation6], 0
    %10 = vsyncpa [#allocation4], 0
    // Predicated region
    $region2: #{tpu_custom_call.1} parent=1 // pred_check
      _
    $region3: #{tpu_custom_call.1} parent=1 // pred_check_branch
      %12 = sbr.rel (0) target = $region5
    $region4: #{tpu_custom_call.1} parent=1 // pred_region
      %s14 = ssub.s32 256, 256
      %15 = vsyncadd [#allocation3], %s14
      %s17 = sshll.u32 [#allocation2], 4
      %s18 = int_to_ptr.vmem [resolvable:$true] %s17
      %20 = dma.hbm_to_vmem [thread:$0]  %s0, 256, %s18, [#allocation3]
    $region5: #{tpu_custom_call.1} parent=1 // pred_fallthru
      _
    // Predicated region
    $region6: #{tpu_custom_call.1} parent=1 // pred_check
      _
    $region7: #{tpu_custom_call.1} parent=1 // pred_check_branch
      %22 = sbr.rel (0) target = $region9
    $region8: #{tpu_custom_call.1} parent=1 // pred_region
      %s24 = ssub.s32 1536, 1536
      %25 = vsyncadd [#allocation6], %s24
      %s26 = sshll.u32 [#allocation5], 4
      %s27 = int_to_ptr.vmem [resolvable:$true] %s26
      %32 = dma.hbm_to_vmem [thread:$0]  %s1, 1536, %s27, [#allocation6], 64, 64, 4
    $region9: #{tpu_custom_call.1} parent=1 // pred_fallthru
      _
    // Predicated region
    $region10: #{tpu_custom_call.1} parent=1 // pred_check
      _
    $region11: #{tpu_custom_call.1} parent=1 // pred_check_branch
      %34 = sbr.rel (0) target = $region13
    $region12: #{tpu_custom_call.1} parent=1 // pred_region
      _
    $region13: #{tpu_custom_call.1} parent=1 // pred_fallthru
      _
    // Predicated region
    $region14: #{tpu_custom_call.1} parent=1 // pred_check
      _
    $region15: #{tpu_custom_call.1} parent=1 // pred_check_branch
      %36 = sbr.rel (0) target = $region17
    $region16: #{tpu_custom_call.1} parent=1 // pred_region
      %37 = dma.done [#allocation3], 256
    $region17: #{tpu_custom_call.1} parent=1 // pred_fallthru
      _
    // Predicated region
    $region18: #{tpu_custom_call.1} parent=1 // pred_check
      _
    $region19: #{tpu_custom_call.1} parent=1 // pred_check_branch
      %39 = sbr.rel (0) target = $region21
    $region20: #{tpu_custom_call.1} parent=1 // pred_region
      %40 = dma.done [#allocation6], 1536
    $region21: #{tpu_custom_call.1} parent=1 // pred_fallthru
      _
    %v42 = vld [vmem:[#allocation2] sm:$0xff]
    %v43 = vld [vmem:[#allocation2 + $0x8] sm:$0xff]
    %v44 = vpack.c.bf16 %v42, %v42
    %v45 = vpack.c.bf16 %v43, %v43
    %v46 = vld [vmem:[#allocation5] sm:$0xf]
    %v47 = vld [vmem:[#allocation5 + $0x4] sm:$0xf]
    %v48 = vld [vmem:[#allocation5 + $0x8] sm:$0xf]
    %v49 = vld [vmem:[#allocation5 + $0xc] sm:$0xf]
    %v50 = vld [vmem:[#allocation5 + $0x10] sm:$0xf]
    %v51 = vld [vmem:[#allocation5 + $0x14] sm:$0xf]
    %v52 = vld [vmem:[#allocation5 + $0x18] sm:$0xf]
    %v53 = vld [vmem:[#allocation5 + $0x1c] sm:$0xf]
    %v54 = vld [vmem:[#allocation5 + $0x20] sm:$0xf]
    %v55 = vld [vmem:[#allocation5 + $0x24] sm:$0xf]
    %v56 = vld [vmem:[#allocation5 + $0x28] sm:$0xf]
    %v57 = vld [vmem:[#allocation5 + $0x2c] sm:$0xf]
    %v58 = vld [vmem:[#allocation5 + $0x30] sm:$0xf]
    %v59 = vld [vmem:[#allocation5 + $0x34] sm:$0xf]
    %v60 = vld [vmem:[#allocation5 + $0x38] sm:$0xf]
    %v61 = vld [vmem:[#allocation5 + $0x3c] sm:$0xf]
    %v62 = vld [vmem:[#allocation5 + $0x40] sm:$0xf]
    %v63 = vld [vmem:[#allocation5 + $0x44] sm:$0xf]
    %v64 = vld [vmem:[#allocation5 + $0x48] sm:$0xf]
    %v65 = vld [vmem:[#allocation5 + $0x4c] sm:$0xf]
    %v66 = vld [vmem:[#allocation5 + $0x50] sm:$0xf]
    %v67 = vld [vmem:[#allocation5 + $0x54] sm:$0xf]
    %v68 = vld [vmem:[#allocation5 + $0x58] sm:$0xf]
    %v69 = vld [vmem:[#allocation5 + $0x5c] sm:$0xf]
    %v70 = vld [vmem:[%s2] sm:$0x1]
    %v72 = vlaneseq
    %v73 = vshrl.u32 %v72, 7
    %v74 = vsub.s32 0, %v73
    %v75 = vrot.slane %v70, %v74
    %v101 = vunpack.c.l.b16 %v46
    %v102 = vunpack.c.l.b16 %v47
    %v103 = vunpack.c.l.b16 %v48
    %v104 = vunpack.c.l.b16 %v49
    %v105 = vunpack.c.l.b16 %v50
    %v106 = vunpack.c.l.b16 %v51
    %v107 = vunpack.c.l.b16 %v52
    %v108 = vunpack.c.l.b16 %v53
    %v109 = vunpack.c.l.b16 %v54
    %v110 = vunpack.c.l.b16 %v55
    %v111 = vunpack.c.l.b16 %v56
    %v112 = vunpack.c.l.b16 %v57
    %v113 = vunpack.c.l.b16 %v58
    %v114 = vunpack.c.l.b16 %v59
    %v115 = vunpack.c.l.b16 %v60
    %v116 = vunpack.c.l.b16 %v61
    %v117 = vunpack.c.l.b16 %v62
    %v118 = vunpack.c.l.b16 %v63
    %v119 = vunpack.c.l.b16 %v64
    %v120 = vunpack.c.l.b16 %v65
    %v121 = vunpack.c.l.b16 %v66
    %v122 = vunpack.c.l.b16 %v67
    %v123 = vunpack.c.l.b16 %v68
    %v124 = vunpack.c.l.b16 %v69
    %v125 = vpack.c.b16 %v102, %v101
    %v126 = vpack.c.b16 %v104, %v103
    %v127 = vpack.c.b16 %v106, %v105
    %v128 = vpack.c.b16 %v108, %v107
    %v129 = vpack.c.b16 %v110, %v109
    %v130 = vpack.c.b16 %v112, %v111
    %v131 = vpack.c.b16 %v114, %v113
    %v132 = vpack.c.b16 %v116, %v115
    %v133 = vpack.c.b16 %v118, %v117
    %v134 = vpack.c.b16 %v120, %v119
    %v135 = vpack.c.b16 %v122, %v121
    %v136 = vpack.c.b16 %v124, %v123
    %vm149 = vcmask 523264
    %v151 = vsel %vm149, %v45, 0
    %153 = vmatprep.subr.bf16.mxu0 0
    %154 = vmatpush1.bf16.msra.mxu0 %v132
    %155 = vmatprep.subr.bf16.mxu0 0
    %156 = vmatpush1.bf16.msra.mxu0 %v131
    %157 = vmatprep.subr.bf16.mxu0 0
    %158 = vmatpush1.bf16.msra.mxu0 %v130
    %159 = vmatprep.subr.bf16.mxu0 0
    %160 = vmatpush1.bf16.msra.mxu0 %v129
    %161 = vmatprep.subr.bf16.mxu0 0
    %162 = vmatpush1.bf16.msra.mxu0 %v128
    %163 = vmatprep.subr.bf16.mxu0 0
    %164 = vmatpush1.bf16.msra.mxu0 %v127
    %165 = vmatprep.subr.bf16.mxu0 0
    %166 = vmatpush1.bf16.msra.mxu0 %v126
    %167 = vmatprep.subr.bf16.mxu0 0
    %168 = vmatpush1.bf16.msra.mxu0 %v125
    %169 = vmatprep.subr.bf16.mxu0 0
    %170 = vmatpush2.bf16.msra.mxu0 0
    %171 = vmatprep.subr.bf16.mxu0 0
    %172 = vmatpush2.bf16.msra.mxu0 0
    %173 = vmatprep.subr.bf16.mxu0 0
    %174 = vmatpush2.bf16.msra.mxu0 0
    %175 = vmatprep.subr.bf16.mxu0 0
    %176 = vmatpush2.bf16.msra.mxu0 0
    %177 = vmatprep.subr.bf16.mxu0 0
    %178 = vmatpush2.bf16.msra.mxu0 %v136
    %179 = vmatprep.subr.bf16.mxu0 0
    %180 = vmatpush2.bf16.msra.mxu0 %v135
    %181 = vmatprep.subr.bf16.mxu0 0
    %182 = vmatpush2.bf16.msra.mxu0 %v134
    %183 = vmatprep.subr.bf16.mxu0 0
    %184 = vmatpush2.bf16.msra.mxu0 %v133
    %185 = vmatprep.mubr.bf16.mxu0 %v151
    %186 = vmatmul.mubr.bf16.gmra.mxu0 %v44
    %v187 = vpop.f32.mrf.mxu0
    %v188 = vadd.f32 %v75, %v187
    %v189 = vpop.f32.mrf.mxu0
    %v190 = vpop.f32.mrf.mxu0
    %v191 = vpop.f32.mrf.mxu0
    %192 = vdwg.mxu0
    %193 = vst [vmem:[#allocation7] sm:$0xff] %v188
    // Predicated region
    $region22: #{tpu_custom_call.1} parent=1 // pred_check
      _
    $region23: #{tpu_custom_call.1} parent=1 // pred_check_branch
      %195 = sbr.rel (0) target = $region25
    $region24: #{tpu_custom_call.1} parent=1 // pred_region
      %s197 = ssub.s32 128, 128
      %198 = vsyncadd [#allocation4], %s197
      %s200 = sshll.u32 [#allocation7], 4
      %s201 = int_to_ptr.vmem [resolvable:$true] %s200
      %203 = dma.vmem_to_hbm [thread:$0]  %s201, 128, %s3, [#allocation4]
    $region25: #{tpu_custom_call.1} parent=1 // pred_fallthru
      _
    // Predicated region
    $region26: #{tpu_custom_call.1} parent=1 // pred_check
      _
    $region27: #{tpu_custom_call.1} parent=1 // pred_check_branch
      %205 = sbr.rel (0) target = $region29
    $region28: #{tpu_custom_call.1} parent=1 // pred_region
      %206 = dma.done [#allocation4], 128
    $region29: #{tpu_custom_call.1} parent=1 // pred_fallthru
      _
    %207 = vsyncpa [#allocation3], 1
    %208 = vsyncpa [#allocation6], 1
    %209 = vsyncpa [#allocation4], 1

</llo_original>
